<compile_context>
chip_gen: v5e
topology: v5e:2x2
jax: 0.10.0
libtpu: 0.0.40
codegen_flags: <defaults>
</compile_context>

<pallas_src>
import jax
import jax.numpy as jnp
from jax.experimental import pallas as pl
from jax.experimental.pallas import tpu as pltpu


def _round_up(x, m):
    return (x + m - 1) // m * m


def mlp_kernel(x_ref, w1_ref, b1_ref, w2_ref, b2_ref, o_ref):
    # hidden = x @ W1 + b1   (PyTorch: hidden_layer(x)); f32 accumulate on the MXU.
    h = jnp.dot(x_ref[...], w1_ref[...], preferred_element_type=jnp.float32)
    h = h + b1_ref[...]                       # (1, hid) broadcasts over the batch tile
    # out = hidden @ W2 + b2 (PyTorch: output_layer(hidden)); cast h back to the
    # weight dtype for the MXU, keep the f32 accumulate.
    y = jnp.dot(h.astype(w2_ref.dtype), w2_ref[...],
                preferred_element_type=jnp.float32)
    y = y + b2_ref[...]
    o_ref[...] = y.astype(o_ref.dtype)


def mlp_forward(x, w1, b1, w2, b2, *, block_batch=128):
    """x: [B, in], w1: [in, hidden], b1: [hidden], w2: [hidden, out], b2: [out]."""
    B, in_f = x.shape
    hidden = w1.shape[1]
    out_f = w2.shape[1]
    dtype = x.dtype
    itemsize = jnp.dtype(dtype).itemsize

    # ---- lane / sublane padding ------------------------------------------------
    LANE = 128
    SUB = 8 if itemsize >= 4 else 16          # f32 -> 8 sublanes, bf16 -> 16
    in_p = _round_up(in_f, LANE)
    hid_p = _round_up(hidden, LANE)
    out_p = _round_up(out_f, LANE)

    # ---- batch tile sizing against a VMEM budget (v7x-safe: <= ~48 MiB) --------
    VMEM_BUDGET = 48 * 1024 * 1024
    TB = _round_up(min(block_batch, _round_up(B, SUB)), SUB)
    resident = (in_p * hid_p + hid_p + hid_p * out_p + out_p) * itemsize

    def tile_bytes(tb):
        # double-buffered x/out tiles + f32 hidden intermediate
        return 2 * tb * (in_p + out_p) * itemsize + tb * hid_p * 4

    while TB > SUB and resident + tile_bytes(TB) > VMEM_BUDGET:
        TB = max(SUB, _round_up(TB // 2, SUB))
    # TODO(synk): for very large `hidden` (w2 K-dim), add a reduction grid axis with
    # an f32 VMEM acc scratch + pl.when init/finalize instead of one (TB, hid_p) h.

    B_pad = _round_up(max(B, TB), TB)

    # ---- zero-pad operands (exact: padded cols/rows contribute 0) ---------------
    x_p = jnp.pad(x, ((0, B_pad - B), (0, in_p - in_f)))
    w1_p = jnp.pad(w1, ((0, in_p - in_f), (0, hid_p - hidden)))
    b1_p = jnp.pad(b1, (0, hid_p - hidden)).reshape(1, hid_p)
    w2_p = jnp.pad(w2, ((0, hid_p - hidden), (0, out_p - out_f)))
    b2_p = jnp.pad(b2, (0, out_p - out_f)).reshape(1, out_p)

    grid = (B_pad // TB,)

    cost = pl.CostEstimate(
        flops=2 * B_pad * in_p * hid_p + 2 * B_pad * hid_p * out_p,
        transcendentals=0,
        bytes_accessed=(B_pad * in_p + in_p * hid_p + hid_p
                        + hid_p * out_p + out_p + B_pad * out_p) * itemsize,
    )

    out_padded = pl.pallas_call(
        mlp_kernel,
        out_shape=jax.ShapeDtypeStruct((B_pad, out_p), dtype),
        grid_spec=pltpu.PrefetchScalarGridSpec(
            num_scalar_prefetch=0,
            grid=grid,
            in_specs=[
                pl.BlockSpec((TB, in_p), lambda i: (i, 0)),      # streamed per tile
                pl.BlockSpec((in_p, hid_p), lambda i: (0, 0)),   # VMEM-resident
                pl.BlockSpec((1, hid_p), lambda i: (0, 0)),      # VMEM-resident
                pl.BlockSpec((hid_p, out_p), lambda i: (0, 0)),  # VMEM-resident
                pl.BlockSpec((1, out_p), lambda i: (0, 0)),      # VMEM-resident
            ],
            out_specs=pl.BlockSpec((TB, out_p), lambda i: (i, 0)),
        ),
        compiler_params=pltpu.CompilerParams(
            dimension_semantics=("parallel",),                   # 2 TCs on v7x
            vmem_limit_bytes=VMEM_BUDGET,
        ),
        cost_estimate=cost,
    )(x_p, w1_p, b1_p, w2_p, b2_p)

    return out_padded[:B, :out_f]


def init_mlp_params(key, in_feature, hidden_units, out_feature):
    """Deterministic init mirroring nn.Linear's U(-1/sqrt(fan_in), 1/sqrt(fan_in))."""
    k1, k2, k3, k4 = jax.random.split(key, 4)
    lim1 = 1.0 / jnp.sqrt(in_feature)
    lim2 = 1.0 / jnp.sqrt(hidden_units)
    # stored as [in, out] (already transposed vs. PyTorch's [out, in])
    w1 = jax.random.uniform(k1, (in_feature, hidden_units), jnp.float32, -lim1, lim1)
    b1 = jax.random.uniform(k2, (hidden_units,), jnp.float32, -lim1, lim1)
    w2 = jax.random.uniform(k3, (hidden_units, out_feature), jnp.float32, -lim2, lim2)
    b2 = jax.random.uniform(k4, (out_feature,), jnp.float32, -lim2, lim2)
    return w1, b1, w2, b2


if __name__ == "__main__":
    # Small shapes consistent with MLP(in_feature, hidden_units, out_feature)
    batch, in_feature, hidden_units, out_feature = 8, 16, 32, 8

    key = jax.random.PRNGKey(0)
    kx, kp = jax.random.split(key)
    x = jax.random.normal(kx, (batch, in_feature), jnp.float32)
    w1, b1, w2, b2 = init_mlp_params(kp, in_feature, hidden_units, out_feature)

    out = mlp_forward(x, w1, b1, w2, b2)
    jax.block_until_ready(out)

    # Pure-JAX reference check (same math as PyTorch: x @ W1.T + b1 -> @ W2.T + b2)
    ref = (x @ w1 + b1) @ w2 + b2
    assert out.shape == (batch, out_feature)
    assert jnp.allclose(out, ref, atol=1e-5, rtol=1e-5)

    print("KERNEL_OK")
</pallas_src>

<mosaic_0001>
module attributes {stable_mosaic.version = 11 : i64} {
  func.func @mlp_kernel(%arg0: i32, %arg1: memref<8x128xf32, #tpu.memory_space<vmem>>, %arg2: memref<128x128xf32, #tpu.memory_space<vmem>>, %arg3: memref<1x128xf32, #tpu.memory_space<vmem>>, %arg4: memref<128x128xf32, #tpu.memory_space<vmem>>, %arg5: memref<1x128xf32, #tpu.memory_space<vmem>>, %arg6: memref<8x128xf32, #tpu.memory_space<vmem>>) attributes {dimension_semantics = [#tpu.dimension_semantics<parallel>], iteration_bounds = array<i64: 1>, scalar_prefetch = 0 : i64, scratch_operands = 0 : i64, tpu.core_type = #tpu.core_type<tc>, window_params = [{transform_indices = @transform_0, window_bounds = array<i64: 8, 128>}, {pipeline_mode = #tpu.pipeline_mode<synchronous>, transform_indices = @transform_1, window_bounds = array<i64: 128, 128>}, {pipeline_mode = #tpu.pipeline_mode<synchronous>, transform_indices = @transform_2, window_bounds = array<i64: 1, 128>}, {pipeline_mode = #tpu.pipeline_mode<synchronous>, transform_indices = @transform_3, window_bounds = array<i64: 128, 128>}, {pipeline_mode = #tpu.pipeline_mode<synchronous>, transform_indices = @transform_4, window_bounds = array<i64: 1, 128>}, {transform_indices = @transform_5, window_bounds = array<i64: 8, 128>}]} {
    %c0 = arith.constant 0 : index
    %c0_0 = arith.constant 0 : index
    %0 = vector.load %arg1[%c0, %c0_0] : memref<8x128xf32, #tpu.memory_space<vmem>>, vector<8x128xf32>
    %c0_1 = arith.constant 0 : index
    %c0_2 = arith.constant 0 : index
    %1 = vector.load %arg2[%c0_1, %c0_2] : memref<128x128xf32, #tpu.memory_space<vmem>>, vector<128x128xf32>
    %cst = arith.constant dense<0.000000e+00> : vector<8x128xf32>
    %2 = tpu.matmul %0, %1, %cst {dimension_numbers = #tpu.dot_dimension_numbers<[1], [0], [0], [1], [0, 0, 1, 1], [], []>} : vector<8x128xf32>, vector<128x128xf32>, vector<8x128xf32> -> vector<8x128xf32>
    %c0_3 = arith.constant 0 : index
    %c0_4 = arith.constant 0 : index
    %3 = vector.load %arg3[%c0_3, %c0_4] : memref<1x128xf32, #tpu.memory_space<vmem>>, vector<1x128xf32>
    %4 = vector.broadcast %3 : vector<1x128xf32> to vector<8x128xf32>
    %5 = arith.addf %2, %4 : vector<8x128xf32>
    %c0_5 = arith.constant 0 : index
    %c0_6 = arith.constant 0 : index
    %6 = vector.load %arg4[%c0_5, %c0_6] : memref<128x128xf32, #tpu.memory_space<vmem>>, vector<128x128xf32>
    %cst_7 = arith.constant dense<0.000000e+00> : vector<8x128xf32>
    %7 = tpu.matmul %5, %6, %cst_7 {dimension_numbers = #tpu.dot_dimension_numbers<[1], [0], [0], [1], [0, 0, 1, 1], [], []>} : vector<8x128xf32>, vector<128x128xf32>, vector<8x128xf32> -> vector<8x128xf32>
    %c0_8 = arith.constant 0 : index
    %c0_9 = arith.constant 0 : index
    %8 = vector.load %arg5[%c0_8, %c0_9] : memref<1x128xf32, #tpu.memory_space<vmem>>, vector<1x128xf32>
    %9 = vector.broadcast %8 : vector<1x128xf32> to vector<8x128xf32>
    %10 = arith.addf %7, %9 : vector<8x128xf32>
    %c0_10 = arith.constant 0 : index
    %c0_11 = arith.constant 0 : index
    %11 = vector.load %arg6[%c0_10, %c0_11] : memref<8x128xf32, #tpu.memory_space<vmem>>, vector<8x128xf32>
    tpu.vector_store %arg6[%c0_10, %c0_11], %10 {strides = array<i32>} : memref<8x128xf32, #tpu.memory_space<vmem>>, vector<8x128xf32>,
    return
  }
  func.func @transform_0(%arg0: i32) -> (i32, i32) {
    %c0_i32 = arith.constant 0 : i32
    %c0_i32_0 = arith.constant 0 : i32
    return %arg0, %c0_i32 : i32, i32
  }
  func.func @transform_1(%arg0: i32) -> (i32, i32) {
    %c0_i32 = arith.constant 0 : i32
    %c0_i32_0 = arith.constant 0 : i32
    %c0_i32_1 = arith.constant 0 : i32
    return %c0_i32, %c0_i32_0 : i32, i32
  }
  func.func @transform_2(%arg0: i32) -> (i32, i32) {
    %c0_i32 = arith.constant 0 : i32
    %c0_i32_0 = arith.constant 0 : i32
    %c0_i32_1 = arith.constant 0 : i32
    return %c0_i32, %c0_i32_0 : i32, i32
  }
  func.func @transform_3(%arg0: i32) -> (i32, i32) {
    %c0_i32 = arith.constant 0 : i32
    %c0_i32_0 = arith.constant 0 : i32
    %c0_i32_1 = arith.constant 0 : i32
    return %c0_i32, %c0_i32_0 : i32, i32
  }
  func.func @transform_4(%arg0: i32) -> (i32, i32) {
    %c0_i32 = arith.constant 0 : i32
    %c0_i32_0 = arith.constant 0 : i32
    %c0_i32_1 = arith.constant 0 : i32
    return %c0_i32, %c0_i32_0 : i32, i32
  }
  func.func @transform_5(%arg0: i32) -> (i32, i32) {
    %c0_i32 = arith.constant 0 : i32
    %c0_i32_0 = arith.constant 0 : i32
    return %arg0, %c0_i32 : i32, i32
  }
}

</mosaic_0001>

<llo_original>
// kernel: tpu_custom_call.1
$region0: #{tpu_custom_call.1}
  #allocation0 [shape = 'u32[]', space=smem, size = 0x4, offset = 0x4, fixed_abs, tag = 'smem constant byte address 0x4 - core index']
  #allocation1 [shape = 'u32[72,128]{1,0:T(1,128)}', space=vmem, size = 0x9000, scoped, tag = 'internal scratch']
  %s0 = inlined_call_operand.hbm [shape: f32[8,128], index: 0, kind: input, shape index: {}]
  %s1 = inlined_call_operand.hbm [shape: f32[128,128], index: 1, kind: input, shape index: {}]
  %s2 = inlined_call_operand.vmem [shape: f32[1,128], index: 2, kind: input, shape index: {}]
  %s3 = inlined_call_operand.hbm [shape: f32[128,128], index: 3, kind: input, shape index: {}]
  %s4 = inlined_call_operand.vmem [shape: f32[1,128], index: 4, kind: input, shape index: {}]
  %s5 = inlined_call_operand.hbm [shape: f32[8,128], index: 5, kind: output, shape index: {}]
  %s6 = sld [smem:[#allocation0]]
  $region42: #{tpu_custom_call.1} parent=0
    _
  %s8 = ssub.s32 1, %s6
  %s9 = scalar_select 0, %s8, %s6
  $region1: #{tpu_custom_call.1} parent=0
    #allocation2 [shape = 'u8[4096]{0}', space=vmem, size = 0x1000, scoped, tag = 'input window, operand 0, single buffered']
    #allocation3 [shape = 's32[1]{0}', space=sflag, size = 0x4, scoped, tag = 'scoped memory for tpu_custom_call.1']
    #allocation4 [shape = 's32[1]{0}', space=sflag, size = 0x4, scoped, tag = 'scoped memory for tpu_custom_call.1']
    #allocation5 [shape = 'u8[65536]{0}', space=vmem, size = 0x10000, scoped, tag = 'input window, operand 1, single buffered']
    #allocation6 [shape = 's32[1]{0}', space=sflag, size = 0x4, scoped, tag = 'scoped memory for tpu_custom_call.1']
    #allocation7 [shape = 'u8[65536]{0}', space=vmem, size = 0x10000, scoped, tag = 'input window, operand 3, single buffered']
    #allocation8 [shape = 'u8[4096]{0}', space=vmem, size = 0x1000, scoped, tag = 'output window, operand 0, single buffered']
    %10 = vsyncpa [#allocation3], 0
    %11 = vsyncpa [#allocation6], 0
    %12 = vsyncpa [#allocation4], 0
    // Predicated region
    $region2: #{tpu_custom_call.1} parent=1 // pred_check
      _
    $region3: #{tpu_custom_call.1} parent=1 // pred_check_branch
      %14 = sbr.rel (0) target = $region5
    $region4: #{tpu_custom_call.1} parent=1 // pred_region
      %16 = vsyncadd [#allocation3], 0
      %s18 = sshll.u32 %s0, 4
      %s19 = int_to_ptr.hbm [resolvable:$true] %s18
      %s20 = sshll.u32 [#allocation2], 4
      %s21 = int_to_ptr.vmem [resolvable:$true] %s20
      %23 = dma.hbm_to_vmem [thread:$0]  %s19, 128, %s21, [#allocation3]
    $region5: #{tpu_custom_call.1} parent=1 // pred_fallthru
      _
    // Predicated region
    $region6: #{tpu_custom_call.1} parent=1 // pred_check
      _
    $region7: #{tpu_custom_call.1} parent=1 // pred_check_branch
      %25 = sbr.rel (0) target = $region9
    $region8: #{tpu_custom_call.1} parent=1 // pred_region
      %27 = vsyncadd [#allocation6], 0
      %s28 = sshll.u32 %s1, 4
      %s29 = int_to_ptr.hbm [resolvable:$true] %s28
      %s30 = sshll.u32 [#allocation5], 4
      %s31 = int_to_ptr.vmem [resolvable:$true] %s30
      %36 = dma.hbm_to_vmem [thread:$0]  %s29, 2048, %s31, [#allocation6], 128, 128, 8
    $region9: #{tpu_custom_call.1} parent=1 // pred_fallthru
      _
    // Predicated region
    $region10: #{tpu_custom_call.1} parent=1 // pred_check
      _
    $region11: #{tpu_custom_call.1} parent=1 // pred_check_branch
      %38 = sbr.rel (0) target = $region13
    $region12: #{tpu_custom_call.1} parent=1 // pred_region
      _
    $region13: #{tpu_custom_call.1} parent=1 // pred_fallthru
      _
    // Predicated region
    $region14: #{tpu_custom_call.1} parent=1 // pred_check
      _
    $region15: #{tpu_custom_call.1} parent=1 // pred_check_branch
      %40 = sbr.rel (0) target = $region17
    $region16: #{tpu_custom_call.1} parent=1 // pred_region
      %42 = vsyncadd [#allocation6], 0
      %s43 = sshll.u32 %s3, 4
      %s44 = int_to_ptr.hbm [resolvable:$true] %s43
      %s45 = sshll.u32 [#allocation7], 4
      %s46 = int_to_ptr.vmem [resolvable:$true] %s45
      %51 = dma.hbm_to_vmem [thread:$0]  %s44, 2048, %s46, [#allocation6], 128, 128, 8
    $region17: #{tpu_custom_call.1} parent=1 // pred_fallthru
      _
    // Predicated region
    $region18: #{tpu_custom_call.1} parent=1 // pred_check
      _
    $region19: #{tpu_custom_call.1} parent=1 // pred_check_branch
      %53 = sbr.rel (0) target = $region21
    $region20: #{tpu_custom_call.1} parent=1 // pred_region
      _
    $region21: #{tpu_custom_call.1} parent=1 // pred_fallthru
      _
    // Predicated region
    $region22: #{tpu_custom_call.1} parent=1 // pred_check
      _
    $region23: #{tpu_custom_call.1} parent=1 // pred_check_branch
      %55 = sbr.rel (0) target = $region25
    $region24: #{tpu_custom_call.1} parent=1 // pred_region
      %57 = dma.done [#allocation3], 128
    $region25: #{tpu_custom_call.1} parent=1 // pred_fallthru
      _
    // Predicated region
    $region26: #{tpu_custom_call.1} parent=1 // pred_check
      _
    $region27: #{tpu_custom_call.1} parent=1 // pred_check_branch
      %59 = sbr.rel (0) target = $region29
    $region28: #{tpu_custom_call.1} parent=1 // pred_region
      %61 = dma.done [#allocation6], 2048
    $region29: #{tpu_custom_call.1} parent=1 // pred_fallthru
      _
    // Predicated region
    $region30: #{tpu_custom_call.1} parent=1 // pred_check
      _
    $region31: #{tpu_custom_call.1} parent=1 // pred_check_branch
      %63 = sbr.rel (0) target = $region33
    $region32: #{tpu_custom_call.1} parent=1 // pred_region
      %65 = dma.done [#allocation6], 2048
    $region33: #{tpu_custom_call.1} parent=1 // pred_fallthru
      _
    %v66 = vld [vmem:[#allocation2] sm:$0xff]
    %v67 = vld [vmem:[#allocation5] sm:$0xff]
    %v68 = vld [vmem:[#allocation5 + $0x8] sm:$0xff]
    %v69 = vld [vmem:[#allocation5 + $0x10] sm:$0xff]
    %v70 = vld [vmem:[#allocation5 + $0x18] sm:$0xff]
    %v71 = vld [vmem:[#allocation5 + $0x20] sm:$0xff]
    %v72 = vld [vmem:[#allocation5 + $0x28] sm:$0xff]
    %v73 = vld [vmem:[#allocation5 + $0x30] sm:$0xff]
    %v74 = vld [vmem:[#allocation5 + $0x38] sm:$0xff]
    %v75 = vld [vmem:[#allocation5 + $0x40] sm:$0xff]
    %v76 = vld [vmem:[#allocation5 + $0x48] sm:$0xff]
    %v77 = vld [vmem:[#allocation5 + $0x50] sm:$0xff]
    %v78 = vld [vmem:[#allocation5 + $0x58] sm:$0xff]
    %v79 = vld [vmem:[#allocation5 + $0x60] sm:$0xff]
    %v80 = vld [vmem:[#allocation5 + $0x68] sm:$0xff]
    %v81 = vld [vmem:[#allocation5 + $0x70] sm:$0xff]
    %v82 = vld [vmem:[#allocation5 + $0x78] sm:$0xff]
    %v83 = vld [vmem:[%s2] sm:$0x1]
    %v85 = vperm.slane %v83, 0
    %87 = vmatpush.msra.mxu0 %v82
    %88 = vmatpush.msra.mxu0 %v81
    %89 = vmatpush.msra.mxu0 %v80
    %90 = vmatpush.msra.mxu0 %v79
    %91 = vmatpush.msra.mxu0 %v78
    %92 = vmatpush.msra.mxu0 %v77
    %93 = vmatpush.msra.mxu0 %v76
    %94 = vmatpush.msra.mxu0 %v75
    %95 = vmatpush.msra.mxu0 %v74
    %96 = vmatpush.msra.mxu0 %v73
    %97 = vmatpush.msra.mxu0 %v72
    %98 = vmatpush.msra.mxu0 %v71
    %99 = vmatpush.msra.mxu0 %v70
    %100 = vmatpush.msra.mxu0 %v69
    %101 = vmatpush.msra.mxu0 %v68
    %102 = vmatpush.msra.mxu0 %v67
    %103 = vmatmul.f32.gmra.mxu0 %v66
    %v104 = vpop.f32.mrf.mxu0
    %v105 = vadd.f32 %v85, %v104
    %106 = vdwg.mxu0
    %v107 = vld [vmem:[#allocation7] sm:$0xff]
    %v108 = vld [vmem:[#allocation7 + $0x8] sm:$0xff]
    %v109 = vld [vmem:[#allocation7 + $0x10] sm:$0xff]
    %v110 = vld [vmem:[#allocation7 + $0x18] sm:$0xff]
    %v111 = vld [vmem:[#allocation7 + $0x20] sm:$0xff]
    %v112 = vld [vmem:[#allocation7 + $0x28] sm:$0xff]
    %v113 = vld [vmem:[#allocation7 + $0x30] sm:$0xff]
    %v114 = vld [vmem:[#allocation7 + $0x38] sm:$0xff]
    %v115 = vld [vmem:[#allocation7 + $0x40] sm:$0xff]
    %v116 = vld [vmem:[#allocation7 + $0x48] sm:$0xff]
    %v117 = vld [vmem:[#allocation7 + $0x50] sm:$0xff]
    %v118 = vld [vmem:[#allocation7 + $0x58] sm:$0xff]
    %v119 = vld [vmem:[#allocation7 + $0x60] sm:$0xff]
    %v120 = vld [vmem:[#allocation7 + $0x68] sm:$0xff]
    %v121 = vld [vmem:[#allocation7 + $0x70] sm:$0xff]
    %v122 = vld [vmem:[#allocation7 + $0x78] sm:$0xff]
    %v123 = vld [vmem:[%s4] sm:$0x1]
    %v125 = vperm.slane %v123, 0
    %127 = vmatpush.msra.mxu0 %v122
    %128 = vmatpush.msra.mxu0 %v121
    %129 = vmatpush.msra.mxu0 %v120
    %130 = vmatpush.msra.mxu0 %v119
    %131 = vmatpush.msra.mxu0 %v118
    %132 = vmatpush.msra.mxu0 %v117
    %133 = vmatpush.msra.mxu0 %v116
    %134 = vmatpush.msra.mxu0 %v115
    %135 = vmatpush.msra.mxu0 %v114
    %136 = vmatpush.msra.mxu0 %v113
    %137 = vmatpush.msra.mxu0 %v112
    %138 = vmatpush.msra.mxu0 %v111
    %139 = vmatpush.msra.mxu0 %v110
    %140 = vmatpush.msra.mxu0 %v109
    %141 = vmatpush.msra.mxu0 %v108
    %142 = vmatpush.msra.mxu0 %v107
    %143 = vmatmul.f32.gmra.mxu0 %v105
    %v144 = vpop.f32.mrf.mxu0
    %v145 = vadd.f32 %v125, %v144
    %146 = vdwg.mxu0
    %147 = vst [vmem:[#allocation8] sm:$0xff] %v145
    // Predicated region
    $region34: #{tpu_custom_call.1} parent=1 // pred_check
      _
    $region35: #{tpu_custom_call.1} parent=1 // pred_check_branch
      %149 = sbr.rel (0) target = $region37
    $region36: #{tpu_custom_call.1} parent=1 // pred_region
      %151 = vsyncadd [#allocation4], 0
      %s153 = sshll.u32 [#allocation8], 4
      %s154 = int_to_ptr.vmem [resolvable:$true] %s153
      %s155 = sshll.u32 %s5, 4
      %s156 = int_to_ptr.hbm [resolvable:$true] %s155
      %158 = dma.vmem_to_hbm [thread:$0]  %s154, 128, %s156, [#allocation4]
    $region37: #{tpu_custom_call.1} parent=1 // pred_fallthru
      _
    // Predicated region
    $region38: #{tpu_custom_call.1} parent=1 // pred_check
      _
    $region39: #{tpu_custom_call.1} parent=1 // pred_check_branch
      %160 = sbr.rel (0) target = $region41
    $region40: #{tpu_custom_call.1} parent=1 // pred_region
      %162 = dma.done [#allocation4], 128
    $region41: #{tpu_custom_call.1} parent=1 // pred_fallthru
      _
    %163 = vsyncpa [#allocation3], 1
    %164 = vsyncpa [#allocation6], 1
    %165 = vsyncpa [#allocation4], 1

</llo_original>
